<compile_context>
chip_gen: v5e
topology: v5e:2x2
jax: 0.10.0
libtpu: 0.0.40
codegen_flags: <defaults>
</compile_context>

<pallas_src>
import functools
import math

import jax
import jax.numpy as jnp
from jax import lax
from jax.experimental import pallas as pl
from jax.experimental.pallas import tpu as pltpu

LN_EPS = 1e-5                                  # torch nn.LayerNorm default
VMEM_LIMIT_BYTES = 32 * 1024 * 1024            # >= scoped default on all current gens


def _round_up(v, m):
    return (v + m - 1) // m * m


# ---------------------------------------------------------------------------
# In-kernel helpers
# ---------------------------------------------------------------------------

def _dropout_draw(y, p):
    """Inverted dropout.  PRNG must already be seeded (once per grid step);
    consecutive calls just advance the stateful stream (no re-seeding)."""
    if p <= 0.0:
        return y
    if p >= 1.0:                              # torch drops everything at p=1
        return jnp.zeros_like(y)
    bits = pltpu.bitcast(pltpu.prng_random_bits(y.shape), jnp.uint32)
    thr = jnp.uint32(min(int(p * 4294967296.0), 4294967295))
    keep = bits >= thr
    return jnp.where(keep, y * jnp.float32(1.0 / (1.0 - p)), jnp.zeros_like(y))


def _layer_norm(y, gamma, beta):
    mu = jnp.mean(y, axis=-1, keepdims=True)
    var = jnp.mean(jnp.square(y - mu), axis=-1, keepdims=True)
    return (y - mu) * lax.rsqrt(var + LN_EPS) * gamma + beta


def _mish(h):
    # mish(h) = h * tanh(softplus(h)) = h * ((1+e^h)^2 - 1) / ((1+e^h)^2 + 1)
    # -> a single EUP transcendental (exp); clamp keeps (1+e^h)^2 finite in f32.
    t = 1.0 + jnp.exp(jnp.minimum(h, 30.0))
    t2 = t * t
    return h * (t2 - 1.0) / (t2 + 1.0)


# ---------------------------------------------------------------------------
# Kernel 1: fused patch projection + cls token + positional encoding + dropout
#   padded_patches[b] @ W_proj  +  add_table
#   (row 0 of add_table = cls_token + pe[0]; rows 1..S-1 = b_proj + pe[i];
#    padded rows are zero.)
# ---------------------------------------------------------------------------

def _embed_kernel(seed_ref, p_ref, w_ref, t_ref, o_ref, *, dropout_p):
    x = p_ref[0]                                             # (S_pad, P_pad) f32
    y = jnp.dot(x.astype(w_ref.dtype), w_ref[...],           # bf16 MXU, f32 acc
                preferred_element_type=jnp.float32)
    y = y + t_ref[...]
    if dropout_p > 0.0:
        pltpu.prng_seed(seed_ref[0] * jnp.int32(1000003)
                        + pl.program_id(0) * jnp.int32(8191))
        y = _dropout_draw(y, dropout_p)
    o_ref[0] = y.astype(o_ref.dtype)


def embed_tokens(padded_patches, w_proj, add_table, *, dropout_p, seed):
    b, s, pd = padded_patches.shape
    d = w_proj.shape[1]
    seed_arr = jnp.full((1,), seed, dtype=jnp.int32)
    flops = 2 * b * s * pd * d
    nbytes = 4 * b * s * pd + 2 * pd * d + 4 * s * d + 4 * b * s * d
    return pl.pallas_call(
        functools.partial(_embed_kernel, dropout_p=float(dropout_p)),
        out_shape=jax.ShapeDtypeStruct((b, s, d), jnp.float32),
        grid_spec=pltpu.PrefetchScalarGridSpec(
            num_scalar_prefetch=1,
            grid=(b,),
            in_specs=[
                pl.BlockSpec((1, s, pd), lambda i, sref: (i, 0, 0)),
                pl.BlockSpec((pd, d), lambda i, sref: (0, 0)),
                pl.BlockSpec((s, d), lambda i, sref: (0, 0)),
            ],
            out_specs=pl.BlockSpec((1, s, d), lambda i, sref: (i, 0, 0)),
        ),
        compiler_params=pltpu.CompilerParams(
            dimension_semantics=("parallel",),
            vmem_limit_bytes=VMEM_LIMIT_BYTES),
        cost_estimate=pl.CostEstimate(flops=int(flops), transcendentals=0,
                                      bytes_accessed=int(nbytes)),
    )(seed_arr, padded_patches, w_proj, add_table)


# ---------------------------------------------------------------------------
# Kernel 2: fused encoder layer (one ViTBlock)
#   x = x + dropout(LN(MHA(x)))          (shared gamma/beta, as in the module)
#   x = x + dropout(LN(W2 * Mish(W1 x + b1) + b2))
# ---------------------------------------------------------------------------

def _encoder_layer_kernel(seed_ref, x_ref, wqkv_ref, wo_ref, w1_ref, w2_ref,
                          bqkv_ref, b1_ref, vecd_ref, o_ref, *,
                          num_heads, seq_valid, dropout_p, layer_salt):
    x = x_ref[0].astype(jnp.float32)                         # (S, D)
    s_len, d_model = x.shape
    dk = d_model // num_heads
    cdt = wqkv_ref.dtype                                     # bf16 compute dtype

    if dropout_p > 0.0:
        # Seed ONCE per grid step; all _dropout_draw calls below just advance
        # the stateful stream (no per-head re-seeding).
        pltpu.prng_seed(seed_ref[0] * jnp.int32(1000003)
                        + pl.program_id(0) * jnp.int32(8191)
                        + jnp.int32(layer_salt))

    bo = vecd_ref[0:1, :]
    b2 = vecd_ref[1:2, :]
    gamma = vecd_ref[2:3, :]
    beta = vecd_ref[3:4, :]

    # ---- multi-head self-attention --------------------------------------
    # One fused, lane-dense (S, D) @ (D, 3D) MXU matmul for Q|K|V.
    qkv = jnp.dot(x.astype(cdt), wqkv_ref[...],
                  preferred_element_type=jnp.float32) + bqkv_ref[...]

    scale = jnp.float32(1.0 / math.sqrt(dk))
    # Mask the zero-padded key rows (seq padded up to a sublane multiple);
    # tinyViT itself never passes an attention mask (mask=None).
    key_bias = jnp.where(
        lax.broadcasted_iota(jnp.int32, (1, s_len), 1) < seq_valid,
        jnp.float32(0.0), jnp.float32(-1e9))

    # Per-head score/context matmuls, statically unrolled.  The MXU-heavy work
    # (QKV, Wo, FF) is already in big fused matmuls; these (S, dk) contractions
    # are a small fraction of layer FLOPs and stay as plain 2-D dots.
    attn = jnp.zeros((s_len, d_model), jnp.float32)
    for h in range(num_heads):
        qh = qkv[:, h * dk:(h + 1) * dk].astype(cdt)
        kh = qkv[:, d_model + h * dk:d_model + (h + 1) * dk].astype(cdt)
        vh = qkv[:, 2 * d_model + h * dk:2 * d_model + (h + 1) * dk].astype(cdt)
        sc = jnp.einsum('qd,kd->qk', qh, kh,
                        preferred_element_type=jnp.float32) * scale
        sc = sc + key_bias
        sc = sc - jnp.max(sc, axis=-1, keepdims=True)
        e = jnp.exp(sc)
        probs = e * pl.reciprocal(jnp.sum(e, axis=-1, keepdims=True), approx=True)
        probs = _dropout_draw(probs, dropout_p)
        head = jnp.dot(probs.astype(cdt), vh, preferred_element_type=jnp.float32)
        # ctx @ Wo == sum_h head_h @ Wo[h]   (K-split of one (S,D)@(D,D) matmul)
        attn = attn + jnp.dot(head.astype(cdt), wo_ref[h],
                              preferred_element_type=jnp.float32)
    attn = attn + bo

    x = x + _dropout_draw(_layer_norm(attn, gamma, beta), dropout_p)

    # ---- feed-forward (Mish) ---------------------------------------------
    h1 = jnp.dot(x.astype(cdt), w1_ref[...],
                 preferred_element_type=jnp.float32) + b1_ref[...]
    h1 = _mish(h1)
    y = jnp.dot(h1.astype(cdt), w2_ref[...],
                preferred_element_type=jnp.float32) + b2
    y = _dropout_draw(_layer_norm(y, gamma, beta), dropout_p)

    o_ref[0] = (x + y).astype(o_ref.dtype)


def encoder_layer(x, blk, *, num_heads, seq_valid, dropout_p, seed, layer_salt):
    b, s, d = x.shape
    hid = blk["w1"].shape[1]
    dk = d // num_heads
    seed_arr = jnp.full((1,), seed, dtype=jnp.int32)
    flops = b * (8 * s * d * d + 4 * s * s * d + 4 * s * d * hid)
    trans = b * (num_heads * s * s + s * hid)
    nbytes = (2 * b * s * d * 4
              + (3 * d * d + d * d + 2 * d * hid) * 2      # bf16 weights
              + (3 * d + 4 * d + hid) * 4)                  # f32 biases / LN
    kernel = functools.partial(
        _encoder_layer_kernel, num_heads=num_heads, seq_valid=seq_valid,
        dropout_p=float(dropout_p), layer_salt=layer_salt)
    return pl.pallas_call(
        kernel,
        out_shape=jax.ShapeDtypeStruct((b, s, d), x.dtype),
        grid_spec=pltpu.PrefetchScalarGridSpec(
            num_scalar_prefetch=1,
            grid=(b,),
            in_specs=[
                pl.BlockSpec((1, s, d), lambda i, sref: (i, 0, 0)),
                pl.BlockSpec((d, 3 * d), lambda i, sref: (0, 0)),
                pl.BlockSpec((num_heads, dk, d), lambda i, sref: (0, 0, 0)),
                pl.BlockSpec((d, hid), lambda i, sref: (0, 0)),
                pl.BlockSpec((hid, d), lambda i, sref: (0, 0)),
                pl.BlockSpec((1, 3 * d), lambda i, sref: (0, 0)),
                pl.BlockSpec((1, hid), lambda i, sref: (0, 0)),
                pl.BlockSpec((4, d), lambda i, sref: (0, 0)),
            ],
            out_specs=pl.BlockSpec((1, s, d), lambda i, sref: (i, 0, 0)),
        ),
        compiler_params=pltpu.CompilerParams(
            dimension_semantics=("parallel",),
            vmem_limit_bytes=VMEM_LIMIT_BYTES),
        cost_estimate=pl.CostEstimate(flops=int(flops), transcendentals=int(trans),
                                      bytes_accessed=int(nbytes)),
    )(seed_arr, x, blk["w_qkv"], blk["wo_heads"], blk["w1"], blk["w2"],
      blk["b_qkv"], blk["b1"], blk["vec_d"])


# ---------------------------------------------------------------------------
# Parameter construction & one-time packing (layout only, not compute)
# ---------------------------------------------------------------------------

def _build_pos_enc(d_model, seq_len):
    pos = jnp.arange(seq_len, dtype=jnp.float32)[:, None]
    denom = jnp.exp(jnp.arange(0, d_model, 2, dtype=jnp.float32)
                    * (-math.log(10000.0) / d_model))
    pe = jnp.zeros((seq_len, d_model), jnp.float32)
    pe = pe.at[:, 0::2].set(jnp.sin(pos * denom))
    pe = pe.at[:, 1::2].set(jnp.cos(pos * denom))
    return pe                                               # (S, D)


def extract_patches(x, chunk_size):
    """torch unfold(2,cs,cs).unfold(3,cs,cs).permute(0,2,3,1,4,5).view(B,N,C*cs*cs)."""
    b, c, hgt, wid = x.shape
    nh, nw = hgt // chunk_size, wid // chunk_size
    p = x.reshape(b, c, nh, chunk_size, nw, chunk_size)
    p = p.transpose(0, 2, 4, 1, 3, 5)
    return p.reshape(b, nh * nw, c * chunk_size * chunk_size)


def init_tiny_vit_params(key, *, d_model, hid_size, layers, num_chunks,
                         chunk_size, num_chan, num_classes):
    seq_len = num_chunks + 1
    patch_dim = num_chan * chunk_size * chunk_size
    keys = iter(jax.random.split(key, 16 + 16 * layers))

    def dense_w(fin, fout):
        std = math.sqrt(2.0 / (fin + fout))                  # xavier-normal-ish
        return jax.random.normal(next(keys), (fin, fout), jnp.float32) * std

    def bias(n):
        return jax.random.uniform(next(keys), (n,), jnp.float32, -0.05, 0.05)

    params = {
        "w_proj": dense_w(patch_dim, d_model),
        "b_proj": bias(d_model),
        "cls_token": jax.random.normal(next(keys), (d_model,), jnp.float32) * 0.02,
        "pos_enc": _build_pos_enc(d_model, seq_len),
        "w_cls": dense_w(d_model, num_classes),
        "b_cls": bias(num_classes),
        "blocks": [],
    }
    for _ in range(layers):
        params["blocks"].append({
            "wq": dense_w(d_model, d_model), "bq": bias(d_model),
            "wk": dense_w(d_model, d_model), "bk": bias(d_model),
            "wv": dense_w(d_model, d_model), "bv": bias(d_model),
            "wo": dense_w(d_model, d_model), "bo": bias(d_model),
            "gamma": jnp.ones((d_model,), jnp.float32),
            "beta": bias(d_model),
            "w1": dense_w(d_model, hid_size), "b1": bias(hid_size),
            "w2": dense_w(hid_size, d_model), "b2": bias(d_model),
        })
    return params


def pack_params_for_kernels(params, *, num_heads, compute_dtype=jnp.bfloat16):
    """One-time packing into kernel-ready, padded, bf16 weight tensors.

    Done once (not per forward call): fused QKV weight, head-major Wo,
    pre-built cls/pos-enc/bias add-table, zero-padded patch projection.
    Weights go to bf16 (native MXU operand dtype, halves VMEM residency);
    biases / LayerNorm params stay f32.
    """
    d = params["w_proj"].shape[1]
    pd = params["w_proj"].shape[0]
    seq = params["pos_enc"].shape[0]
    seq_pad = _round_up(seq, 8)
    patch_pad = _round_up(pd, 128)
    dk = d // num_heads

    w_proj = jnp.zeros((patch_pad, d), jnp.float32).at[:pd, :].set(params["w_proj"])
    add_table = jnp.zeros((seq_pad, d), jnp.float32)
    add_table = add_table.at[:seq, :].set(params["pos_enc"])
    add_table = add_table.at[0, :].add(params["cls_token"])
    add_table = add_table.at[1:seq, :].add(params["b_proj"])

    packed = {
        "w_proj": w_proj.astype(compute_dtype),
        "add_table": add_table,
        "w_cls": params["w_cls"],
        "b_cls": params["b_cls"],
        "blocks": [],
    }
    for blk in params["blocks"]:
        packed["blocks"].append({
            "w_qkv": jnp.concatenate([blk["wq"], blk["wk"], blk["wv"]],
                                     axis=1).astype(compute_dtype),
            "b_qkv": jnp.concatenate([blk["bq"], blk["bk"], blk["bv"]])[None, :],
            "wo_heads": blk["wo"].reshape(num_heads, dk, d).astype(compute_dtype),
            "w1": blk["w1"].astype(compute_dtype),
            "b1": blk["b1"][None, :],
            "w2": blk["w2"].astype(compute_dtype),
            "vec_d": jnp.stack([blk["bo"], blk["b2"], blk["gamma"], blk["beta"]]),
        })
    return packed


# ---------------------------------------------------------------------------
# Full forward pass (Pallas path)
# ---------------------------------------------------------------------------

def tiny_vit_forward(packed, x, *, num_heads, chunk_size, num_chunks,
                     dropout_p=0.0, seed=0):
    b = x.shape[0]
    patches = extract_patches(x, chunk_size)                 # (B, nC, P)
    pd = patches.shape[2]
    seq = num_chunks + 1
    seq_pad = packed["add_table"].shape[0]
    patch_pad = packed["w_proj"].shape[0]

    # Zero-padded patch slab: row 0 is the cls position (projects to zero; the
    # cls embedding itself lives in add_table row 0), rows >= seq are padding.
    padded = jnp.zeros((b, seq_pad, patch_pad), jnp.float32)
    padded = padded.at[:, 1:seq, :pd].set(patches.astype(jnp.float32))

    h = embed_tokens(padded, packed["w_proj"], packed["add_table"],
                     dropout_p=dropout_p, seed=seed)

    for li, blk in enumerate(packed["blocks"]):
        h = encoder_layer(h, blk, num_heads=num_heads, seq_valid=seq,
                          dropout_p=dropout_p, seed=seed, layer_salt=li + 1)

    # Classifier on the cls token: a (B,D)@(D,C) matmul is smaller than a
    # pallas_call launch + pipeline prologue, so it stays in plain XLA.
    return h[:, 0, :] @ packed["w_cls"] + packed["b_cls"]


# ---------------------------------------------------------------------------
# Pure-JAX f32 reference (eval mode, dropout = identity)
# ---------------------------------------------------------------------------

def _ln_ref(y, gamma, beta):
    mu = y.mean(-1, keepdims=True)
    var = ((y - mu) ** 2).mean(-1, keepdims=True)
    return (y - mu) / jnp.sqrt(var + LN_EPS) * gamma + beta


def tiny_vit_reference(params, x, *, num_heads, chunk_size):
    b = x.shape[0]
    d = params["w_proj"].shape[1]
    patches = extract_patches(x, chunk_size)
    h = patches @ params["w_proj"] + params["b_proj"]
    cls = jnp.broadcast_to(params["cls_token"][None, None, :], (b, 1, d))
    h = jnp.concatenate([cls, h], axis=1)
    h = h + params["pos_enc"][None, :h.shape[1], :]
    for blk in params["blocks"]:
        s = h.shape[1]
        dk = d // num_heads
        q = (h @ blk["wq"] + blk["bq"]).reshape(b, s, num_heads, dk).transpose(0, 2, 1, 3)
        k = (h @ blk["wk"] + blk["bk"]).reshape(b, s, num_heads, dk).transpose(0, 2, 1, 3)
        v = (h @ blk["wv"] + blk["bv"]).reshape(b, s, num_heads, dk).transpose(0, 2, 1, 3)
        sc = jnp.einsum('bhqd,bhkd->bhqk', q, k) / math.sqrt(dk)
        probs = jax.nn.softmax(sc, axis=-1)
        ctx = jnp.einsum('bhqk,bhkd->bhqd', probs, v)
        ctx = ctx.transpose(0, 2, 1, 3).reshape(b, s, d)
        attn = ctx @ blk["wo"] + blk["bo"]
        h = h + _ln_ref(attn, blk["gamma"], blk["beta"])
        z = h @ blk["w1"] + blk["b1"]
        z = z * jnp.tanh(jax.nn.softplus(z))                 # Mish
        ff = z @ blk["w2"] + blk["b2"]
        h = h + _ln_ref(ff, blk["gamma"], blk["beta"])
    return h[:, 0, :] @ params["w_cls"] + params["b_cls"]


# ---------------------------------------------------------------------------
# Main
# ---------------------------------------------------------------------------

if __name__ == "__main__":
    batch, num_chan = 2, 1
    chunk_size, num_chunks = 7, 16              # 28x28 input -> 16 patches + cls
    d_model, num_heads, hid_size = 128, 4, 256  # lane-dense (multiples of 128)
    layers, num_classes = 2, 10
    dropout_p = 0.0                             # eval-equivalent; kernels support p > 0

    height = width = chunk_size * 4             # 28

    key = jax.random.PRNGKey(0)
    kx, kp = jax.random.split(key)
    x = jax.random.normal(kx, (batch, num_chan, height, width), dtype=jnp.float32)
    params = init_tiny_vit_params(
        kp, d_model=d_model, hid_size=hid_size, layers=layers,
        num_chunks=num_chunks, chunk_size=chunk_size, num_chan=num_chan,
        num_classes=num_classes)
    packed = pack_params_for_kernels(params, num_heads=num_heads)

    out = tiny_vit_forward(packed, x, num_heads=num_heads,
                           chunk_size=chunk_size, num_chunks=num_chunks,
                           dropout_p=dropout_p, seed=0)
    out = jax.block_until_ready(out)

    with jax.default_matmul_precision("highest"):
        ref = tiny_vit_reference(params, x, num_heads=num_heads,
                                 chunk_size=chunk_size)
        ref = jax.block_until_ready(ref)

    assert out.shape == (batch, num_classes)
    max_err = float(jnp.max(jnp.abs(out - ref)))
    # Tolerance sized for bf16 MXU operands (kernel path) vs a pure-f32 reference.
    assert jnp.allclose(out, ref, atol=2e-1, rtol=5e-2), (
        f"mismatch vs reference, max abs err = {max_err}")
    print("KERNEL_OK")
</pallas_src>

<mosaic_0001>
module attributes {stable_mosaic.version = 11 : i64} {
  func.func @_embed_kernel(%arg0: i32, %arg1: memref<1xi32, #tpu.memory_space<smem>>, %arg2: memref<1x24x128xf32, #tpu.memory_space<vmem>>, %arg3: memref<128x128xbf16, #tpu.memory_space<vmem>>, %arg4: memref<24x128xf32, #tpu.memory_space<vmem>>, %arg5: memref<1x24x128xf32, #tpu.memory_space<vmem>>) attributes {dimension_semantics = [#tpu.dimension_semantics<parallel>], iteration_bounds = array<i64: 2>, scalar_prefetch = 1 : i64, scratch_operands = 0 : i64, tpu.core_type = #tpu.core_type<tc>, window_params = [{transform_indices = @transform_0, window_bounds = array<i64: 1, 24, 128>}, {pipeline_mode = #tpu.pipeline_mode<synchronous>, transform_indices = @transform_1, window_bounds = array<i64: 128, 128>}, {pipeline_mode = #tpu.pipeline_mode<synchronous>, transform_indices = @transform_2, window_bounds = array<i64: 24, 128>}, {transform_indices = @transform_3, window_bounds = array<i64: 1, 24, 128>}]} {
    %c0 = arith.constant 0 : index
    %c0_0 = arith.constant 0 : index
    %c0_1 = arith.constant 0 : index
    %0 = vector.load %arg2[%c0, %c0_0, %c0_1] : memref<1x24x128xf32, #tpu.memory_space<vmem>>, vector<1x24x128xf32>
    %1 = vector.shape_cast %0 : vector<1x24x128xf32> to vector<24x128xf32>
    %2 = arith.truncf %1 : vector<24x128xf32> to vector<24x128xbf16>
    %c0_2 = arith.constant 0 : index
    %c0_3 = arith.constant 0 : index
    %3 = vector.load %arg3[%c0_2, %c0_3] : memref<128x128xbf16, #tpu.memory_space<vmem>>, vector<128x128xbf16>
    %cst = arith.constant dense<0.000000e+00> : vector<24x128xf32>
    %4 = tpu.matmul %2, %3, %cst {dimension_numbers = #tpu.dot_dimension_numbers<[1], [0], [0], [1], [0, 0, 1, 1], [], []>} : vector<24x128xbf16>, vector<128x128xbf16>, vector<24x128xf32> -> vector<24x128xf32>
    %c0_4 = arith.constant 0 : index
    %c0_5 = arith.constant 0 : index
    %5 = vector.load %arg4[%c0_4, %c0_5] : memref<24x128xf32, #tpu.memory_space<vmem>>, vector<24x128xf32>
    %6 = arith.addf %4, %5 : vector<24x128xf32>
    %c0_6 = arith.constant 0 : index
    %c0_7 = arith.constant 0 : index
    %c0_8 = arith.constant 0 : index
    %7 = vector.load %arg5[%c0_6, %c0_7, %c0_8] : memref<1x24x128xf32, #tpu.memory_space<vmem>>, vector<1x24x128xf32>
    %8 = vector.shape_cast %7 : vector<1x24x128xf32> to vector<24x128xf32>
    %9 = vector.shape_cast %6 : vector<24x128xf32> to vector<1x24x128xf32>
    tpu.vector_store %arg5[%c0_6, %c0_7, %c0_8], %9 {strides = array<i32>} : memref<1x24x128xf32, #tpu.memory_space<vmem>>, vector<1x24x128xf32>,
    return
  }
  func.func @transform_0(%arg0: i32, %arg1: memref<1xi32, #tpu.memory_space<smem>>) -> (i32, i32, i32) {
    %c0_i32 = arith.constant 0 : i32
    %c0_i32_0 = arith.constant 0 : i32
    %c0_i32_1 = arith.constant 0 : i32
    return %arg0, %c0_i32, %c0_i32_0 : i32, i32, i32
  }
  func.func @transform_1(%arg0: i32, %arg1: memref<1xi32, #tpu.memory_space<smem>>) -> (i32, i32) {
    %c0_i32 = arith.constant 0 : i32
    %c0_i32_0 = arith.constant 0 : i32
    %c0_i32_1 = arith.constant 0 : i32
    return %c0_i32, %c0_i32_0 : i32, i32
  }
  func.func @transform_2(%arg0: i32, %arg1: memref<1xi32, #tpu.memory_space<smem>>) -> (i32, i32) {
    %c0_i32 = arith.constant 0 : i32
    %c0_i32_0 = arith.constant 0 : i32
    %c0_i32_1 = arith.constant 0 : i32
    return %c0_i32, %c0_i32_0 : i32, i32
  }
  func.func @transform_3(%arg0: i32, %arg1: memref<1xi32, #tpu.memory_space<smem>>) -> (i32, i32, i32) {
    %c0_i32 = arith.constant 0 : i32
    %c0_i32_0 = arith.constant 0 : i32
    %c0_i32_1 = arith.constant 0 : i32
    return %arg0, %c0_i32, %c0_i32_0 : i32, i32, i32
  }
}

</mosaic_0001>

<llo_original>
// kernel: tpu_custom_call.1
$region0: #{tpu_custom_call.1}
  #allocation0 [shape = 'u32[]', space=smem, size = 0x4, offset = 0x4, fixed_abs, tag = 'smem constant byte address 0x4 - core index']
  #allocation1 [shape = 'u32[72,128]{1,0:T(1,128)}', space=vmem, size = 0x9000, scoped, tag = 'internal scratch']
  #allocation2 [shape = 's32[1]{0}', space=sflag, size = 0x4, scoped, tag = 'scoped memory for tpu_custom_call.1']
  #allocation3 [shape = 's32[1]{0:T(128)S(6)}', space=smem, size = 0x200, scoped, tag = 'prefetched SMEM operand 0']
  %s0 = inlined_call_operand.<no memory space> [shape: s32[1], index: 0, kind: input, shape index: {}]
  %s1 = inlined_call_operand.hbm [shape: f32[2,24,128], index: 1, kind: input, shape index: {}]
  %s2 = inlined_call_operand.hbm [shape: bf16[128,128], index: 2, kind: input, shape index: {}]
  %s3 = inlined_call_operand.hbm [shape: f32[24,128], index: 3, kind: input, shape index: {}]
  %s4 = inlined_call_operand.hbm [shape: f32[2,24,128], index: 4, kind: output, shape index: {}]
  %s5 = sld [smem:[#allocation0]]
  $region57: #{tpu_custom_call.1} parent=0
    _
  %s7 = ssub.s32 1, %s5
  %s8 = scalar_select 0, %s7, %s5
  %9 = sst [smem:[#allocation3]] %s0
  $region1: #{tpu_custom_call.1} parent=0
    #allocation4 [shape = 'u8[24576]{0}', space=vmem, size = 0x6000, scoped, tag = 'input window, operand 1']
    #allocation5 [shape = 's32[2]{0}', space=sflag, size = 0x8, scoped, tag = 'scoped memory for tpu_custom_call.1']
    #allocation6 [shape = 's32[2]{0}', space=sflag, size = 0x8, scoped, tag = 'scoped memory for tpu_custom_call.1']
    #allocation7 [shape = 'u8[32768]{0}', space=vmem, size = 0x8000, scoped, tag = 'input window, operand 2, single buffered']
    #allocation8 [shape = 's32[1]{0}', space=sflag, size = 0x4, scoped, tag = 'scoped memory for tpu_custom_call.1']
    #allocation9 [shape = 'u8[12288]{0}', space=vmem, size = 0x3000, scoped, tag = 'input window, operand 3, single buffered']
    #allocation10 [shape = 'u8[24576]{0}', space=vmem, size = 0x6000, scoped, tag = 'output window, operand 0']
    %10 = vsyncpa [#allocation5], 0
    %s11 = scalar_lea.sflag [#allocation5], 1
    %12 = vsyncpa %s11, 0
    %13 = vsyncpa [#allocation8], 0
    %14 = vsyncpa [#allocation6], 0
    %s15 = scalar_lea.sflag [#allocation6], 1
    %16 = vsyncpa %s15, 0
    loop: start=0, step=1, limit=4
    $region2: #{tpu_custom_call.1} parent=1 // loop_pre_header
      _
    $region3: #{tpu_custom_call.1} parent=1 // loop_header
      %s18 = sphi 0, %s22
      %p19 = scmp.ge.s32.totalorder %s18, 4
      %s28 = sphi 0, %s30
      %s31 = sphi 0, %s28
      %s32 = sphi 0, %s31
      %s48 = sphi 0, %s32
      %s52 = sphi 0, %s52
      %s54 = sphi 0, %s52
      %s55 = sphi 0, %s54
      %s69 = sphi 0, %s55
      %s73 = sphi 0, %s73
      %s75 = sphi 0, %s73
      %s76 = sphi 0, %s75
      %s90 = sphi 0, %s76
      %s96 = sphi 0, %s98
      %s99 = sphi 0, %s96
      %s100 = sphi 0, %s99
      %s116 = sphi 0, %s100
    $region4: #{tpu_custom_call.1} parent=1 // loop_header_branch
      %21 = sbr.rel (%p19) target = $region8
    $region5: #{tpu_custom_call.1} parent=1 // loop_body
      %s23 = ssub.s32 %s18, 1
      %s24 = ssub.s32 %s18, 2
      %s25 = sadd.s32 %s18, 1
      %s26 = ssub.s32 %s18, %s25
      %p27 = scmp.eq.s32.totalorder %s26, 0
      %s29 = sadd.s32 %s28, 1
      %s30 = scalar_select %p27, %s28, %s29
      %p33 = pneg %p27
      %p34 = scmp.eq.s32.totalorder %s18, 1
      %p35 = por %p33, %p34
      %p36 = scmp.ne.s32.totalorder %s28, %s31
      %p37 = scmp.eq.s32.totalorder %s18, 0
      %p38 = por %p36, %p37
      %p39 = scmp.ne.s32.totalorder %s28, %s31
      %p40 = scmp.eq.s32.totalorder %s23, 1
      %p41 = por %p39, %p40
      %p42 = scmp.ne.s32.totalorder %s31, %s32
      %p43 = scmp.eq.s32.totalorder %s23, 0
      %p44 = por %p42, %p43
      %p45 = scmp.ne.s32.totalorder %s31, %s32
      %p46 = scmp.eq.s32.totalorder %s24, 1
      %p47 = por %p45, %p46
      %p49 = scmp.ne.s32.totalorder %s32, %s48
      %p50 = scmp.eq.s32.totalorder %s24, 0
      %p51 = por %p49, %p50
      %s53 = sadd.s32 %s52, 1
      %p56 = scmp.eq.s32.totalorder %s18, 1
      %p57 = scmp.ne.s32.totalorder %s52, %s54
      %p58 = scmp.eq.s32.totalorder %s18, 0
      %p59 = por %p57, %p58
      %p60 = scmp.ne.s32.totalorder %s52, %s54
      %p61 = scmp.eq.s32.totalorder %s23, 1
      %p62 = por %p60, %p61
      %p63 = scmp.ne.s32.totalorder %s54, %s55
      %p64 = scmp.eq.s32.totalorder %s23, 0
      %p65 = por %p63, %p64
      %p66 = scmp.ne.s32.totalorder %s54, %s55
      %p67 = scmp.eq.s32.totalorder %s24, 1
      %p68 = por %p66, %p67
      %p70 = scmp.ne.s32.totalorder %s55, %s69
      %p71 = scmp.eq.s32.totalorder %s24, 0
      %p72 = por %p70, %p71
      %s74 = sadd.s32 %s73, 1
      %p77 = scmp.eq.s32.totalorder %s18, 1
      %p78 = scmp.ne.s32.totalorder %s73, %s75
      %p79 = scmp.eq.s32.totalorder %s18, 0
      %p80 = por %p78, %p79
      %p81 = scmp.ne.s32.totalorder %s73, %s75
      %p82 = scmp.eq.s32.totalorder %s23, 1
      %p83 = por %p81, %p82
      %p84 = scmp.ne.s32.totalorder %s75, %s76
      %p85 = scmp.eq.s32.totalorder %s23, 0
      %p86 = por %p84, %p85
      %p87 = scmp.ne.s32.totalorder %s75, %s76
      %p88 = scmp.eq.s32.totalorder %s24, 1
      %p89 = por %p87, %p88
      %p91 = scmp.ne.s32.totalorder %s76, %s90
      %p92 = scmp.eq.s32.totalorder %s24, 0
      %p93 = por %p91, %p92
      %s94 = ssub.s32 %s18, %s25
      %p95 = scmp.eq.s32.totalorder %s94, 0
      %s97 = sadd.s32 %s96, 1
      %s98 = scalar_select %p95, %s96, %s97
      %p101 = pneg %p95
      %p102 = scmp.eq.s32.totalorder %s18, 1
      %p103 = por %p101, %p102
      %p104 = scmp.ne.s32.totalorder %s96, %s99
      %p105 = scmp.eq.s32.totalorder %s18, 0
      %p106 = por %p104, %p105
      %p107 = scmp.ne.s32.totalorder %s96, %s99
      %p108 = scmp.eq.s32.totalorder %s23, 1
      %p109 = por %p107, %p108
      %p110 = scmp.ne.s32.totalorder %s99, %s100
      %p111 = scmp.eq.s32.totalorder %s23, 0
      %p112 = por %p110, %p111
      %p113 = scmp.ne.s32.totalorder %s99, %s100
      %p114 = scmp.eq.s32.totalorder %s24, 1
      %p115 = por %p113, %p114
      %p117 = scmp.ne.s32.totalorder %s100, %s116
      %p118 = scmp.eq.s32.totalorder %s24, 0
      %p119 = por %p117, %p118
      %p120 = scmp.le.s32.totalorder 1, %s18
      %p121 = scmp.lt.s32.totalorder %s18, 3
      %p122 = pnand %p120, %p121
      %p123 = pneg %p122
      // Predicated region
      $region9: #{tpu_custom_call.1} parent=5 // pred_check
        _
      $region10: #{tpu_custom_call.1} parent=5 // pred_check_branch
        %125 = sbr.rel (%p122) target = $region12
      $region11: #{tpu_custom_call.1} parent=5 // pred_region
        %s126 = ssub.s32 %s18, 1
        // Predicated region
        $region13: #{tpu_custom_call.1} parent=11 // pred_check
          %p127 = pneg %p65
        $region14: #{tpu_custom_call.1} parent=11 // pred_check_branch
          %129 = sbr.rel (%p127) target = $region16
        $region15: #{tpu_custom_call.1} parent=11 // pred_region
          %131 = vsyncadd [#allocation8], 0
          %s132 = sshll.u32 %s2, 4
          %s133 = int_to_ptr.hbm [resolvable:$true] %s132
          %s134 = sshll.u32 [#allocation7], 4
          %s135 = int_to_ptr.vmem [resolvable:$true] %s134
          %140 = dma.hbm_to_vmem [thread:$0]  %s133, 1024, %s135, [#allocation8], 64, 64, 4
        $region16: #{tpu_custom_call.1} parent=11 // pred_fallthru
          _
        // Predicated region
        $region17: #{tpu_custom_call.1} parent=11 // pred_check
          %p141 = pneg %p86
        $region18: #{tpu_custom_call.1} parent=11 // pred_check_branch
          %143 = sbr.rel (%p141) target = $region20
        $region19: #{tpu_custom_call.1} parent=11 // pred_region
          %145 = vsyncadd [#allocation8], 0
          %s146 = sshll.u32 %s3, 4
          %s147 = int_to_ptr.hbm [resolvable:$true] %s146
          %s148 = sshll.u32 [#allocation9], 4
          %s149 = int_to_ptr.vmem [resolvable:$true] %s148
          %154 = dma.hbm_to_vmem [thread:$0]  %s147, 384, %s149, [#allocation8], 128, 128, 8
        $region20: #{tpu_custom_call.1} parent=11 // pred_fallthru
          _
      $region12: #{tpu_custom_call.1} parent=5 // pred_fallthru
        _
      %p155 = scmp.lt.s32.totalorder %s18, 2
      // Predicated region
      $region21: #{tpu_custom_call.1} parent=5 // pred_check
        %p156 = pneg %p155
      $region22: #{tpu_custom_call.1} parent=5 // pred_check_branch
        %158 = sbr.rel (%p156) target = $region24
      $region23: #{tpu_custom_call.1} parent=5 // pred_region
        // Predicated region
        $region25: #{tpu_custom_call.1} parent=23 // pred_check
          %p159 = pneg %p38
        $region26: #{tpu_custom_call.1} parent=23 // pred_check_branch
          %161 = sbr.rel (%p159) target = $region28
        $region27: #{tpu_custom_call.1} parent=23 // pred_region
          %s162 = sand.u32 %s28, 1
          %s163 = scalar_lea.sflag [#allocation5], %s162
          %s164 = sand.u32 %s28, 1
          %s165 = smul.addr %s164, 24
          %s166 = scalar_lea.vmem [#allocation4], %s165
          %168 = vsyncadd %s163, 0
          %s169 = smul.addr %s18, 3
          %s170 = smul.addr %s169, 8
          %s171 = scalar_lea.hbm %s1, %s170
          %s172 = sshll.u32 %s171, 4
          %s173 = int_to_ptr.hbm [resolvable:$true] %s172
          %s174 = sshll.u32 %s166, 4
          %s175 = int_to_ptr.vmem [resolvable:$true] %s174
          %180 = dma.hbm_to_vmem [thread:$0]  %s173, 384, %s175, %s163, 128, 128, 8
        $region28: #{tpu_custom_call.1} parent=23 // pred_fallthru
          _
      $region24: #{tpu_custom_call.1} parent=5 // pred_fallthru
        _
      %p181 = scmp.le.s32.totalorder 1, %s18
      %p182 = scmp.lt.s32.totalorder %s18, 3
      %p183 = pnand %p181, %p182
      %p184 = pneg %p183
      // Predicated region
      $region29: #{tpu_custom_call.1} parent=5 // pred_check
        _
      $region30: #{tpu_custom_call.1} parent=5 // pred_check_branch
        %186 = sbr.rel (%p183) target = $region32
      $region31: #{tpu_custom_call.1} parent=5 // pred_region
        %s187 = ssub.s32 %s18, 1
        %s188 = sand.u32 %s31, 1
        %s189 = scalar_lea.sflag [#allocation5], %s188
        %s190 = sand.u32 %s31, 1
        %s191 = smul.addr %s190, 24
        %s192 = scalar_lea.vmem [#allocation4], %s191
        // Predicated region
        $region33: #{tpu_custom_call.1} parent=31 // pred_check
          %p193 = pneg %p44
        $region34: #{tpu_custom_call.1} parent=31 // pred_check_branch
          %195 = sbr.rel (%p193) target = $region36
        $region35: #{tpu_custom_call.1} parent=31 // pred_region
          %197 = dma.done %s189, 384
        $region36: #{tpu_custom_call.1} parent=31 // pred_fallthru
          _
        // Predicated region
        $region37: #{tpu_custom_call.1} parent=31 // pred_check
          %p198 = pneg %p65
        $region38: #{tpu_custom_call.1} parent=31 // pred_check_branch
          %200 = sbr.rel (%p198) target = $region40
        $region39: #{tpu_custom_call.1} parent=31 // pred_region
          %202 = dma.done [#allocation8], 1024
        $region40: #{tpu_custom_call.1} parent=31 // pred_fallthru
          _
        // Predicated region
        $region41: #{tpu_custom_call.1} parent=31 // pred_check
          %p203 = pneg %p86
        $region42: #{tpu_custom_call.1} parent=31 // pred_check_branch
          %205 = sbr.rel (%p203) target = $region44
        $region43: #{tpu_custom_call.1} parent=31 // pred_region
          %207 = dma.done [#allocation8], 384
        $region44: #{tpu_custom_call.1} parent=31 // pred_fallthru
          _
        %s208 = sand.u32 %s31, 1
        %s209 = scalar_lea.sflag [#allocation5], %s208
        %s210 = sand.u32 %s31, 1
        %s211 = smul.addr %s210, 24
        %s212 = scalar_lea.vmem [#allocation4], %s211
        %p213 = pneg %p44
        %p214 = pneg %p41
        %p215 = pneg %p65
        %p216 = pneg %p62
        %p217 = pneg %p86
        %p218 = pneg %p83
        %p219 = pneg %p112
        %p220 = pneg %p109
        %s221 = sand.u32 %s99, 1
        %s222 = scalar_lea.sflag [#allocation6], %s221
        %s223 = sand.u32 %s99, 1
        %s224 = smul.addr %s223, 24
        %s225 = scalar_lea.vmem [#allocation10], %s224
        %v226 = vld [vmem:[%s192] sm:$0xff]
        %v227 = vld [vmem:[%s192 + $0x8] sm:$0xff]
        %v228 = vld [vmem:[%s192 + $0x10] sm:$0xff]
        %v229 = vpack.c.bf16 %v227, %v226
        %v230 = vpack.c.bf16 %v228, %v228
        %v231 = vld [vmem:[#allocation7] sm:$0xf]
        %v232 = vld [vmem:[#allocation7 + $0x4] sm:$0xf]
        %v233 = vld [vmem:[#allocation7 + $0x8] sm:$0xf]
        %v234 = vld [vmem:[#allocation7 + $0xc] sm:$0xf]
        %v235 = vld [vmem:[#allocation7 + $0x10] sm:$0xf]
        %v236 = vld [vmem:[#allocation7 + $0x14] sm:$0xf]
        %v237 = vld [vmem:[#allocation7 + $0x18] sm:$0xf]
        %v238 = vld [vmem:[#allocation7 + $0x1c] sm:$0xf]
        %v239 = vld [vmem:[#allocation7 + $0x20] sm:$0xf]
        %v240 = vld [vmem:[#allocation7 + $0x24] sm:$0xf]
        %v241 = vld [vmem:[#allocation7 + $0x28] sm:$0xf]
        %v242 = vld [vmem:[#allocation7 + $0x2c] sm:$0xf]
        %v243 = vld [vmem:[#allocation7 + $0x30] sm:$0xf]
        %v244 = vld [vmem:[#allocation7 + $0x34] sm:$0xf]
        %v245 = vld [vmem:[#allocation7 + $0x38] sm:$0xf]
        %v246 = vld [vmem:[#allocation7 + $0x3c] sm:$0xf]
        %v247 = vld [vmem:[#allocation9] sm:$0xff]
        %v248 = vld [vmem:[#allocation9 + $0x8] sm:$0xff]
        %v249 = vld [vmem:[#allocation9 + $0x10] sm:$0xff]
        %v266 = vunpack.c.l.b16 %v231
        %v267 = vunpack.c.l.b16 %v232
        %v268 = vunpack.c.l.b16 %v233
        %v269 = vunpack.c.l.b16 %v234
        %v270 = vunpack.c.l.b16 %v235
        %v271 = vunpack.c.l.b16 %v236
        %v272 = vunpack.c.l.b16 %v237
        %v273 = vunpack.c.l.b16 %v238
        %v274 = vunpack.c.l.b16 %v239
        %v275 = vunpack.c.l.b16 %v240
        %v276 = vunpack.c.l.b16 %v241
        %v277 = vunpack.c.l.b16 %v242
        %v278 = vunpack.c.l.b16 %v243
        %v279 = vunpack.c.l.b16 %v244
        %v280 = vunpack.c.l.b16 %v245
        %v281 = vunpack.c.l.b16 %v246
        %v282 = vpack.c.b16 %v267, %v266
        %v283 = vpack.c.b16 %v269, %v268
        %v284 = vpack.c.b16 %v271, %v270
        %v285 = vpack.c.b16 %v273, %v272
        %v286 = vpack.c.b16 %v275, %v274
        %v287 = vpack.c.b16 %v277, %v276
        %v288 = vpack.c.b16 %v279, %v278
        %v289 = vpack.c.b16 %v281, %v280
        %298 = vmatpush.bf16.msra.mxu0 %v289
        %299 = vmatpush.bf16.msra.mxu0 %v288
        %300 = vmatpush.bf16.msra.mxu0 %v287
        %301 = vmatpush.bf16.msra.mxu0 %v286
        %302 = vmatpush.bf16.msra.mxu0 %v285
        %303 = vmatpush.bf16.msra.mxu0 %v284
        %304 = vmatpush.bf16.msra.mxu0 %v283
        %305 = vmatpush.bf16.msra.mxu0 %v282
        %306 = vmatmul.bf16.gmra.mxu0 %v229
        %v307 = vpop.f32.mrf.mxu0
        %v308 = vadd.f32 %v247, %v307
        %v309 = vpop.f32.mrf.mxu0
        %v310 = vadd.f32 %v248, %v309
        %311 = vmatmul.bf16.gmra.mxu0 %v230
        %v312 = vpop.f32.mrf.mxu0
        %v313 = vadd.f32 %v249, %v312
        %v314 = vpop.f32.mrf.mxu0
        %315 = vdwg.mxu0
        %316 = vst [vmem:[%s225] sm:$0xff] %v308
        %317 = vst [vmem:[%s225 + $0x8] sm:$0xff] %v310
        %318 = vst [vmem:[%s225 + $0x10] sm:$0xff] %v313
        %s319 = sand.u32 %s99, 1
        %s320 = scalar_lea.sflag [#allocation6], %s319
        %s321 = sand.u32 %s99, 1
        %s322 = smul.addr %s321, 24
        %s323 = scalar_lea.vmem [#allocation10], %s322
        // Predicated region
        $region45: #{tpu_custom_call.1} parent=31 // pred_check
          %p324 = pneg %p109
        $region46: #{tpu_custom_call.1} parent=31 // pred_check_branch
          %326 = sbr.rel (%p324) target = $region48
        $region47: #{tpu_custom_call.1} parent=31 // pred_region
          %328 = vsyncadd %s320, 0
          %s329 = smul.addr %s23, 3
          %s330 = smul.addr %s329, 8
          %s331 = scalar_lea.hbm %s4, %s330
          %s332 = sshll.u32 %s323, 4
          %s333 = int_to_ptr.vmem [resolvable:$true] %s332
          %s334 = sshll.u32 %s331, 4
          %s335 = int_to_ptr.hbm [resolvable:$true] %s334
          %340 = dma.vmem_to_hbm [thread:$0]  %s333, 384, %s335, %s320, 128, 128, 8
        $region48: #{tpu_custom_call.1} parent=31 // pred_fallthru
          _
      $region32: #{tpu_custom_call.1} parent=5 // pred_fallthru
        _
      %p341 = scmp.le.s32.totalorder 2, %s18
      // Predicated region
      $region49: #{tpu_custom_call.1} parent=5 // pred_check
        %p342 = pneg %p341
      $region50: #{tpu_custom_call.1} parent=5 // pred_check_branch
        %344 = sbr.rel (%p342) target = $region52
      $region51: #{tpu_custom_call.1} parent=5 // pred_region
        %s345 = ssub.s32 %s18, 2
        // Predicated region
        $region53: #{tpu_custom_call.1} parent=51 // pred_check
          %p346 = pneg %p115
        $region54: #{tpu_custom_call.1} parent=51 // pred_check_branch
          %348 = sbr.rel (%p346) target = $region56
        $region55: #{tpu_custom_call.1} parent=51 // pred_region
          %s349 = sand.u32 %s100, 1
          %s350 = scalar_lea.sflag [#allocation6], %s349
          %s351 = sand.u32 %s100, 1
          %s352 = smul.addr %s351, 24
          %s353 = scalar_lea.vmem [#allocation10], %s352
          %355 = dma.done %s350, 384
        $region56: #{tpu_custom_call.1} parent=51 // pred_fallthru
          _
      $region52: #{tpu_custom_call.1} parent=5 // pred_fallthru
        _
    $region6: #{tpu_custom_call.1} parent=1 // loop_footer
      %s22 = sadd.s32 1, %s18
    $region7: #{tpu_custom_call.1} parent=1 // loop_footer_branch
      %17 = sbr.rel target = $region3
    $region8: #{tpu_custom_call.1} parent=1 // loop_exit
      _
    %356 = vsyncpa [#allocation5], 1
    %s357 = scalar_lea.sflag [#allocation5], 1
    %358 = vsyncpa %s357, 1
    %359 = vsyncpa [#allocation8], 1
    %360 = vsyncpa [#allocation6], 1
    %s361 = scalar_lea.sflag [#allocation6], 1
    %362 = vsyncpa %s361, 1

</llo_original>
